<compile_context>
chip_gen: v7x
topology: tpu7x:2x2x1
jax: 0.10.0
libtpu: 0.0.40
codegen_flags: <defaults>
</compile_context>

<pallas_src>
import jax
import jax.numpy as jnp
from jax import lax
from jax.experimental import pallas as pl
from jax.experimental.pallas import tpu as pltpu

_INV_SQRT2 = 0.7071067811865476


def _ffn_kernel(x_ref, w1v_ref, w1g_ref, b1v_ref, b1g_ref, w2_ref, b2_ref,
                o_ref, acc_ref):
    h = pl.program_id(1)

    @pl.when(h == 0)
    def _():
        # Fold the output bias into the accumulator init (removes the epilogue add).
        acc_ref[...] = jnp.broadcast_to(b2_ref[...].astype(jnp.float32),
                                        acc_ref.shape)

    # First linear (value / gate column slabs of this hidden tile): native-dtype
    # operands on the MXU, f32 accumulation.
    x = x_ref[...]
    a = jnp.dot(x, w1v_ref[...], preferred_element_type=jnp.float32)
    g = jnp.dot(x, w1g_ref[...], preferred_element_type=jnp.float32)
    a = a + b1v_ref[...].astype(jnp.float32)
    g = g + b1g_ref[...].astype(jnp.float32)

    # GEGLU with exact (erf) GELU in f32 -- matches torch.nn.functional.gelu default.
    gelu_g = 0.5 * g * (1.0 + lax.erf(g * jnp.float32(_INV_SQRT2)))
    act = (a * gelu_g).astype(w2_ref.dtype)

    # Second linear: accumulate this hidden tile's contribution.
    acc_ref[...] += jnp.dot(act, w2_ref[...], preferred_element_type=jnp.float32)

    @pl.when(h == pl.num_programs(1) - 1)
    def _():
        o_ref[...] = acc_ref[...].astype(o_ref.dtype)


def _device_vmem_and_cores():
    """Return (physical VMEM bytes per TensorCore, TensorCores per chip)."""
    kind = ""
    try:
        kind = jax.devices()[0].device_kind.lower()
    except Exception:
        pass
    if "v7" in kind:
        return 64 * 1024 * 1024, 2
    if "v5" in kind or "v6" in kind:
        return 128 * 1024 * 1024, 1
    # Unknown chip: try the trace-time query, else stay conservative (v7x-sized).
    try:
        cap = int(pltpu.get_tpu_info().vmem_capacity_bytes)
        if cap > 0:
            return cap, 1
    except Exception:
        pass
    return 64 * 1024 * 1024, 1


def _round8(n):
    return max(8, ((n + 7) // 8) * 8)


def _largest_aligned_divisor(total, target, align):
    """Largest t <= target, multiple of `align`, dividing `total`; fallback: total."""
    t = min(target, total)
    t -= t % align
    while t >= align:
        if total % t == 0:
            return t
        t -= align
    return total


def _vmem_need_bytes(tm, th, D, act_bytes, w_bytes):
    x_stream = 2 * tm * D * act_bytes        # x tile stream (double-buffered)
    out_stream = 2 * tm * D * act_bytes      # out tile stream (double-buffered)
    w_slabs = 2 * 3 * D * th * w_bytes       # W1 value + W1 gate + W2 slabs (x2 buf)
    biases = 2 * (2 * th + D) * w_bytes      # b1 value/gate + b2 slabs (x2 buf)
    acc = tm * D * 4                         # f32 accumulator scratch
    ew = 3 * tm * th * 4                     # a, g, act f32 GEGLU intermediates
    return x_stream + out_stream + w_slabs + biases + acc + ew


def _pick_tiles(N, D, H, act_bytes, w_bytes, vmem_cap, n_cores):
    budget = int(0.65 * vmem_cap)

    # Hidden tile: prefer th == H so W1/W2 become VMEM-resident (fetched once).
    th_cands = [H] + [t for t in (2048, 1024, 512, 256, 128) if t < H and H % t == 0]

    # Token tile: multiples of 8, largest first; capped so there are at least
    # n_cores token tiles (v7x megacore) and no more than the padded row count.
    n8 = _round8(N)
    tm_cap = min(n8, _round8(-(-N // n_cores)))
    tm_cands = [t for t in (2048, 1536, 1024, 768, 512, 384, 256, 128, 64, 32, 16, 8)
                if t <= tm_cap]
    if not tm_cands or tm_cands[0] != tm_cap:
        tm_cands = [tm_cap] + tm_cands

    for th in th_cands:
        for tm in tm_cands:
            if _vmem_need_bytes(tm, th, D, act_bytes, w_bytes) <= budget:
                return tm, th
    return tm_cands[-1], th_cands[-1]


def feed_forward(x, w1, b1, w2, b2, *, tm=None, th=None):
    """x: (..., D). w1: (D, 2*H), b1: (2*H,), w2: (H, D), b2: (D,).

    Weights are (in_features, out_features) == transpose of torch nn.Linear weight.
    """
    orig_shape = x.shape
    D = orig_shape[-1]
    x2 = x.reshape(-1, D)
    N = x2.shape[0]
    H = w2.shape[0]
    assert w1.shape == (D, 2 * H)
    assert b1.shape == (2 * H,)
    assert w2.shape == (H, D)
    assert b2.shape == (D,)

    act_bytes = jnp.dtype(x.dtype).itemsize
    w_bytes = jnp.dtype(w1.dtype).itemsize
    vmem_cap, n_cores = _device_vmem_and_cores()

    if tm is None or th is None:
        tm_auto, th_auto = _pick_tiles(N, D, H, act_bytes, w_bytes, vmem_cap, n_cores)
        tm = tm_auto if tm is None else tm
        th = th_auto if th is None else th

    # Align/clamp requested tiles.
    tm_eff = max(8, min(_round8(tm), _round8(N)))
    th_eff = _largest_aligned_divisor(H, th, 128)

    n_pad = pl.cdiv(N, tm_eff) * tm_eff
    if n_pad != N:
        x2 = jnp.pad(x2, ((0, n_pad - N), (0, 0)))

    # NOTE: no W1/b1 split here -- the fused arrays are passed twice and the
    # value/gate halves are selected purely via BlockSpec index maps.
    b1_2d = b1.reshape(1, 2 * H)
    b2_2d = b2.reshape(1, D)

    n_th = H // th_eff
    grid = (n_pad // tm_eff, n_th)

    need = _vmem_need_bytes(tm_eff, th_eff, D, act_bytes, w_bytes)
    vmem_limit = int(min(max(int(1.3 * need), 32 * 1024 * 1024),
                         int(0.85 * vmem_cap)))

    out = pl.pallas_call(
        _ffn_kernel,
        out_shape=jax.ShapeDtypeStruct((n_pad, D), x.dtype),
        grid_spec=pltpu.PrefetchScalarGridSpec(
            num_scalar_prefetch=0,
            grid=grid,
            in_specs=[
                pl.BlockSpec((tm_eff, D), lambda i, h: (i, 0)),          # x row tile
                pl.BlockSpec((D, th_eff), lambda i, h: (0, h)),          # W1 value cols
                pl.BlockSpec((D, th_eff), lambda i, h: (0, h + n_th)),   # W1 gate cols
                pl.BlockSpec((1, th_eff), lambda i, h: (0, h)),          # b1 value
                pl.BlockSpec((1, th_eff), lambda i, h: (0, h + n_th)),   # b1 gate
                pl.BlockSpec((th_eff, D), lambda i, h: (h, 0)),          # W2 rows
                pl.BlockSpec((1, D), lambda i, h: (0, 0)),               # b2
            ],
            out_specs=pl.BlockSpec((tm_eff, D), lambda i, h: (i, 0)),
            scratch_shapes=[pltpu.VMEM((tm_eff, D), jnp.float32)],
        ),
        compiler_params=pltpu.CompilerParams(
            dimension_semantics=("parallel", "arbitrary"),
            vmem_limit_bytes=vmem_limit),
    )(x2, w1, w1, b1_2d, b1_2d, w2, b2_2d)

    if n_pad != N:
        out = out[:N]
    return out.reshape(orig_shape)


def _ref_feed_forward(x, w1, b1, w2, b2):
    h = jnp.einsum("...d,dh->...h", x.astype(jnp.float32), w1.astype(jnp.float32))
    h = h + b1.astype(jnp.float32)
    H = w2.shape[0]
    a, g = h[..., :H], h[..., H:]
    act = a * jax.nn.gelu(g, approximate=False)
    out = jnp.einsum("...h,hd->...d", act, w2.astype(jnp.float32)) + b2.astype(jnp.float32)
    return out.astype(x.dtype)


if __name__ == "__main__":
    # Small shapes consistent with FeedForward(dim=128, mult=4); S=9 so the
    # token-padding path is exercised when tm < N.
    B, S, DIM, MULT = 2, 9, 128, 4
    HIDDEN = DIM * MULT  # 512

    key = jax.random.PRNGKey(0)
    k_x, k_w1, k_b1, k_w2, k_b2 = jax.random.split(key, 5)

    x = jax.random.normal(k_x, (B, S, DIM), dtype=jnp.float32)

    # Deterministic synthetic params (fan-in scaled uniform, like nn.Linear init).
    bound1 = 1.0 / (DIM ** 0.5)
    w1 = jax.random.uniform(k_w1, (DIM, HIDDEN * 2), jnp.float32, -bound1, bound1)
    b1 = jax.random.uniform(k_b1, (HIDDEN * 2,), jnp.float32, -bound1, bound1)
    bound2 = 1.0 / (HIDDEN ** 0.5)
    w2 = jax.random.uniform(k_w2, (HIDDEN, DIM), jnp.float32, -bound2, bound2)
    b2 = jax.random.uniform(k_b2, (DIM,), jnp.float32, -bound2, bound2)

    ref = _ref_feed_forward(x, w1, b1, w2, b2)

    # 1) Multi-tile config (tm=8 < N=18, th=128 < H=512): exercises the hidden-axis
    #    accumulation (pl.when init/finalize) and the padded-token slicing path.
    out_tiled = jax.block_until_ready(feed_forward(x, w1, b1, w2, b2, tm=8, th=128))
    assert out_tiled.shape == x.shape
    assert jnp.allclose(out_tiled, ref, atol=1e-3, rtol=1e-3), "tiled path mismatch"

    # 2) Auto-tiled config (weights VMEM-resident, single hidden tile).
    out_auto = jax.block_until_ready(feed_forward(x, w1, b1, w2, b2))
    assert out_auto.shape == x.shape
    assert jnp.allclose(out_auto, ref, atol=1e-3, rtol=1e-3), "auto path mismatch"

    # 3) bf16 path: native-dtype MXU feeds, f32 accumulation; checked against the
    #    f32 reference at a bf16-appropriate tolerance (not just finiteness).
    out_bf16 = jax.block_until_ready(
        feed_forward(x.astype(jnp.bfloat16),
                     w1.astype(jnp.bfloat16), b1.astype(jnp.bfloat16),
                     w2.astype(jnp.bfloat16), b2.astype(jnp.bfloat16),
                     tm=8, th=128))
    assert out_bf16.shape == x.shape
    err = jnp.max(jnp.abs(out_bf16.astype(jnp.float32) - ref))
    assert bool(err < 5e-2), f"bf16 path error too large: {err}"

    print("KERNEL_OK")
</pallas_src>

<mosaic_0001>
module attributes {stable_mosaic.version = 11 : i64} {
  func.func @_ffn_kernel(%arg0: i32, %arg1: i32, %arg2: memref<8x128xf32, #tpu.memory_space<vmem>>, %arg3: memref<128x128xf32, #tpu.memory_space<vmem>>, %arg4: memref<128x128xf32, #tpu.memory_space<vmem>>, %arg5: memref<1x128xf32, #tpu.memory_space<vmem>>, %arg6: memref<1x128xf32, #tpu.memory_space<vmem>>, %arg7: memref<128x128xf32, #tpu.memory_space<vmem>>, %arg8: memref<1x128xf32, #tpu.memory_space<vmem>>, %arg9: memref<8x128xf32, #tpu.memory_space<vmem>>, %arg10: memref<8x128xf32, #tpu.memory_space<vmem>>) attributes {dimension_semantics = [#tpu.dimension_semantics<parallel>, #tpu.dimension_semantics<arbitrary>], iteration_bounds = array<i64: 3, 4>, scalar_prefetch = 0 : i64, scratch_operands = 1 : i64, tpu.core_type = #tpu.core_type<tc>, window_params = [{transform_indices = @transform_0, window_bounds = array<i64: 8, 128>}, {transform_indices = @transform_1, window_bounds = array<i64: 128, 128>}, {transform_indices = @transform_2, window_bounds = array<i64: 128, 128>}, {transform_indices = @transform_3, window_bounds = array<i64: 1, 128>}, {transform_indices = @transform_4, window_bounds = array<i64: 1, 128>}, {transform_indices = @transform_5, window_bounds = array<i64: 128, 128>}, {pipeline_mode = #tpu.pipeline_mode<synchronous>, transform_indices = @transform_6, window_bounds = array<i64: 1, 128>}, {transform_indices = @transform_7, window_bounds = array<i64: 8, 128>}]} {
    %c0_i32 = arith.constant 0 : i32
    %0 = arith.cmpi eq, %arg1, %c0_i32 : i32
    %1 = arith.extui %0 : i1 to i32
    %c0_i32_0 = arith.constant 0 : i32
    %2 = arith.cmpi ne, %1, %c0_i32_0 : i32
    scf.if %2 {
      %c0_22 = arith.constant 0 : index
      %c0_23 = arith.constant 0 : index
      %31 = vector.load %arg8[%c0_22, %c0_23] : memref<1x128xf32, #tpu.memory_space<vmem>>, vector<1x128xf32>
      %32 = vector.shape_cast %31 : vector<1x128xf32> to vector<1x128xf32>
      %33 = vector.broadcast %32 : vector<1x128xf32> to vector<8x128xf32>
      %c0_24 = arith.constant 0 : index
      %c0_25 = arith.constant 0 : index
      %34 = vector.load %arg10[%c0_24, %c0_25] : memref<8x128xf32, #tpu.memory_space<vmem>>, vector<8x128xf32>
      tpu.vector_store %arg10[%c0_24, %c0_25], %33 {strides = array<i32>} : memref<8x128xf32, #tpu.memory_space<vmem>>, vector<8x128xf32>,
    } else {
    }
    %c0 = arith.constant 0 : index
    %c0_1 = arith.constant 0 : index
    %3 = vector.load %arg2[%c0, %c0_1] : memref<8x128xf32, #tpu.memory_space<vmem>>, vector<8x128xf32>
    %c0_2 = arith.constant 0 : index
    %c0_3 = arith.constant 0 : index
    %4 = vector.load %arg3[%c0_2, %c0_3] : memref<128x128xf32, #tpu.memory_space<vmem>>, vector<128x128xf32>
    %cst = arith.constant dense<0.000000e+00> : vector<8x128xf32>
    %5 = tpu.matmul %3, %4, %cst {dimension_numbers = #tpu.dot_dimension_numbers<[1], [0], [0], [1], [0, 0, 1, 1], [], []>} : vector<8x128xf32>, vector<128x128xf32>, vector<8x128xf32> -> vector<8x128xf32>
    %c0_4 = arith.constant 0 : index
    %c0_5 = arith.constant 0 : index
    %6 = vector.load %arg4[%c0_4, %c0_5] : memref<128x128xf32, #tpu.memory_space<vmem>>, vector<128x128xf32>
    %cst_6 = arith.constant dense<0.000000e+00> : vector<8x128xf32>
    %7 = tpu.matmul %3, %6, %cst_6 {dimension_numbers = #tpu.dot_dimension_numbers<[1], [0], [0], [1], [0, 0, 1, 1], [], []>} : vector<8x128xf32>, vector<128x128xf32>, vector<8x128xf32> -> vector<8x128xf32>
    %c0_7 = arith.constant 0 : index
    %c0_8 = arith.constant 0 : index
    %8 = vector.load %arg5[%c0_7, %c0_8] : memref<1x128xf32, #tpu.memory_space<vmem>>, vector<1x128xf32>
    %9 = vector.broadcast %8 : vector<1x128xf32> to vector<8x128xf32>
    %10 = arith.addf %5, %9 : vector<8x128xf32>
    %c0_9 = arith.constant 0 : index
    %c0_10 = arith.constant 0 : index
    %11 = vector.load %arg6[%c0_9, %c0_10] : memref<1x128xf32, #tpu.memory_space<vmem>>, vector<1x128xf32>
    %12 = vector.broadcast %11 : vector<1x128xf32> to vector<8x128xf32>
    %13 = arith.addf %7, %12 : vector<8x128xf32>
    %cst_11 = arith.constant 5.000000e-01 : f32
    %14 = vector.broadcast %cst_11 : f32 to vector<8x128xf32>
    %15 = arith.mulf %14, %13 : vector<8x128xf32>
    %cst_12 = arith.constant 0.707106769 : f32
    %16 = vector.broadcast %cst_12 : f32 to vector<8x128xf32>
    %17 = arith.mulf %13, %16 : vector<8x128xf32>
    %18 = math.erf %17 : vector<8x128xf32>
    %cst_13 = arith.constant 1.000000e+00 : f32
    %19 = vector.broadcast %cst_13 : f32 to vector<8x128xf32>
    %20 = arith.addf %19, %18 : vector<8x128xf32>
    %21 = arith.mulf %15, %20 : vector<8x128xf32>
    %22 = arith.mulf %10, %21 : vector<8x128xf32>
    %c0_14 = arith.constant 0 : index
    %c0_15 = arith.constant 0 : index
    %23 = vector.load %arg10[%c0_14, %c0_15] : memref<8x128xf32, #tpu.memory_space<vmem>>, vector<8x128xf32>
    %c0_16 = arith.constant 0 : index
    %c0_17 = arith.constant 0 : index
    %24 = vector.load %arg7[%c0_16, %c0_17] : memref<128x128xf32, #tpu.memory_space<vmem>>, vector<128x128xf32>
    %cst_18 = arith.constant dense<0.000000e+00> : vector<8x128xf32>
    %25 = tpu.matmul %22, %24, %cst_18 {dimension_numbers = #tpu.dot_dimension_numbers<[1], [0], [0], [1], [0, 0, 1, 1], [], []>} : vector<8x128xf32>, vector<128x128xf32>, vector<8x128xf32> -> vector<8x128xf32>
    %26 = arith.addf %23, %25 : vector<8x128xf32>
    %c0_19 = arith.constant 0 : index
    %c0_20 = arith.constant 0 : index
    %27 = vector.load %arg10[%c0_19, %c0_20] : memref<8x128xf32, #tpu.memory_space<vmem>>, vector<8x128xf32>
    tpu.vector_store %arg10[%c0_19, %c0_20], %26 {strides = array<i32>} : memref<8x128xf32, #tpu.memory_space<vmem>>, vector<8x128xf32>,
    %c3_i32 = arith.constant 3 : i32
    %28 = arith.cmpi eq, %arg1, %c3_i32 : i32
    %29 = arith.extui %28 : i1 to i32
    %c0_i32_21 = arith.constant 0 : i32
    %30 = arith.cmpi ne, %29, %c0_i32_21 : i32
    scf.if %30 {
      %c0_22 = arith.constant 0 : index
      %c0_23 = arith.constant 0 : index
      %31 = vector.load %arg10[%c0_22, %c0_23] : memref<8x128xf32, #tpu.memory_space<vmem>>, vector<8x128xf32>
      %c0_24 = arith.constant 0 : index
      %c0_25 = arith.constant 0 : index
      %32 = vector.load %arg9[%c0_24, %c0_25] : memref<8x128xf32, #tpu.memory_space<vmem>>, vector<8x128xf32>
      tpu.vector_store %arg9[%c0_24, %c0_25], %31 {strides = array<i32>} : memref<8x128xf32, #tpu.memory_space<vmem>>, vector<8x128xf32>,
    } else {
    }
    return
  }
  func.func @transform_0(%arg0: i32, %arg1: i32) -> (i32, i32) {
    %c0_i32 = arith.constant 0 : i32
    %c0_i32_0 = arith.constant 0 : i32
    return %arg0, %c0_i32 : i32, i32
  }
  func.func @transform_1(%arg0: i32, %arg1: i32) -> (i32, i32) {
    %c0_i32 = arith.constant 0 : i32
    %c0_i32_0 = arith.constant 0 : i32
    return %c0_i32, %arg1 : i32, i32
  }
  func.func @transform_2(%arg0: i32, %arg1: i32) -> (i32, i32) {
    %c4_i32 = arith.constant 4 : i32
    %0 = arith.addi %arg1, %c4_i32 : i32
    %c0_i32 = arith.constant 0 : i32
    %c0_i32_0 = arith.constant 0 : i32
    return %c0_i32, %0 : i32, i32
  }
  func.func @transform_3(%arg0: i32, %arg1: i32) -> (i32, i32) {
    %c0_i32 = arith.constant 0 : i32
    %c0_i32_0 = arith.constant 0 : i32
    return %c0_i32, %arg1 : i32, i32
  }
  func.func @transform_4(%arg0: i32, %arg1: i32) -> (i32, i32) {
    %c4_i32 = arith.constant 4 : i32
    %0 = arith.addi %arg1, %c4_i32 : i32
    %c0_i32 = arith.constant 0 : i32
    %c0_i32_0 = arith.constant 0 : i32
    return %c0_i32, %0 : i32, i32
  }
  func.func @transform_5(%arg0: i32, %arg1: i32) -> (i32, i32) {
    %c0_i32 = arith.constant 0 : i32
    %c0_i32_0 = arith.constant 0 : i32
    return %arg1, %c0_i32 : i32, i32
  }
  func.func @transform_6(%arg0: i32, %arg1: i32) -> (i32, i32) {
    %c0_i32 = arith.constant 0 : i32
    %c0_i32_0 = arith.constant 0 : i32
    %c0_i32_1 = arith.constant 0 : i32
    return %c0_i32, %c0_i32_0 : i32, i32
  }
  func.func @transform_7(%arg0: i32, %arg1: i32) -> (i32, i32) {
    %c0_i32 = arith.constant 0 : i32
    %c0_i32_0 = arith.constant 0 : i32
    return %arg0, %c0_i32 : i32, i32
  }
}

</mosaic_0001>

<llo_original>
// kernel: tpu_custom_call.1
$region0: #{tpu_custom_call.1}
  #allocation0 [shape = 'u32[]', space=smem, size = 0x4, offset = 0x4, fixed_abs, tag = 'smem constant byte address 0x4 - core index']
  #allocation1 [shape = 'u32[144,128]{1,0:T(1,128)}', space=vmem, size = 0x12000, scoped, tag = 'internal scratch']
  #allocation2 [shape = 'f32[8,128]{1,0:T(8,128)}', space=vmem, size = 0x1000, scoped, tag = 'scratch operand']
  %s0 = inlined_call_operand.hbm [shape: f32[24,128], index: 0, kind: input, shape index: {}]
  %s1 = inlined_call_operand.hbm [shape: f32[128,1024], index: 1, kind: input, shape index: {}]
  %s2 = inlined_call_operand.hbm [shape: f32[128,1024], index: 2, kind: input, shape index: {}]
  %s3 = inlined_call_operand.vmem [shape: f32[1,1024], index: 3, kind: input, shape index: {}]
  %s4 = inlined_call_operand.hbm [shape: f32[1,1024], index: 4, kind: input, shape index: {}]
  %s5 = inlined_call_operand.hbm [shape: f32[512,128], index: 5, kind: input, shape index: {}]
  %s6 = inlined_call_operand.vmem [shape: f32[1,128], index: 6, kind: input, shape index: {}]
  %s7 = inlined_call_operand.hbm [shape: f32[24,128], index: 7, kind: output, shape index: {}]
  %s8 = sld [smem:[#allocation0]]
  $region89: #{tpu_custom_call.1} parent=0
    _
  %s10 = ssub.s32 1, %s8
  %s11 = scalar_select 0, %s10, %s8
  $region1: #{tpu_custom_call.1} parent=0
    #allocation3 [shape = 'u8[8192]{0}', space=vmem, size = 0x2000, scoped, tag = 'input window, operand 0']
    #allocation4 [shape = 's32[2]{0}', space=sflag, size = 0x8, scoped, tag = 'scoped memory for tpu_custom_call.1']
    #allocation5 [shape = 's32[2]{0}', space=sflag, size = 0x8, scoped, tag = 'scoped memory for tpu_custom_call.1']
    #allocation6 [shape = 'u8[131072]{0}', space=vmem, size = 0x20000, scoped, tag = 'input window, operand 1']
    #allocation7 [shape = 's32[2]{0}', space=sflag, size = 0x8, scoped, tag = 'scoped memory for tpu_custom_call.1']
    #allocation8 [shape = 'u8[131072]{0}', space=vmem, size = 0x20000, scoped, tag = 'input window, operand 2']
    #allocation9 [shape = 'u8[1024]{0}', space=vmem, size = 0x400, scoped, tag = 'input window, operand 4']
    #allocation10 [shape = 's32[2]{0}', space=sflag, size = 0x8, scoped, tag = 'scoped memory for tpu_custom_call.1']
    #allocation11 [shape = 'u8[131072]{0}', space=vmem, size = 0x20000, scoped, tag = 'input window, operand 5']
    #allocation12 [shape = 'u8[8192]{0}', space=vmem, size = 0x2000, scoped, tag = 'output window, operand 0']
    %12 = vsyncpa [#allocation4], 0
    %s13 = scalar_lea.sflag [#allocation4], 1
    %14 = vsyncpa %s13, 0
    %15 = vsyncpa [#allocation7], 0
    %s16 = scalar_lea.sflag [#allocation7], 1
    %17 = vsyncpa %s16, 0
    %18 = vsyncpa [#allocation10], 0
    %s19 = scalar_lea.sflag [#allocation10], 1
    %20 = vsyncpa %s19, 0
    %21 = vsyncpa [#allocation5], 0
    %s22 = scalar_lea.sflag [#allocation5], 1
    %23 = vsyncpa %s22, 0
    loop: start=0, step=1, limit=14
    $region2: #{tpu_custom_call.1} parent=1 // loop_pre_header
      _
    $region3: #{tpu_custom_call.1} parent=1 // loop_header
      %s25 = sphi 0, %s29
      %p26 = scmp.ge.s32.totalorder %s25, 14
      %s32 = sphi 0, %s44
      %s33 = sphi 0, %s40
      %s34 = sphi 0, %s32
      %s35 = sphi 0, %s33
      %s36 = sphi 0, %s34
      %s37 = sphi 0, %s35
      %s47 = sphi 0, %s49
      %s50 = sphi 0, %s47
      %s51 = sphi 0, %s50
      %s67 = sphi 0, %s51
      %s73 = sphi 0, %s75
      %s76 = sphi 0, %s73
      %s77 = sphi 0, %s76
      %s93 = sphi 0, %s77
      %s101 = sphi 0, %s103
      %s104 = sphi 0, %s101
      %s105 = sphi 0, %s104
      %s121 = sphi 0, %s105
      %s127 = sphi 0, %s129
      %s130 = sphi 0, %s127
      %s131 = sphi 0, %s130
      %s147 = sphi 0, %s131
      %s155 = sphi 0, %s157
      %s158 = sphi 0, %s155
      %s159 = sphi 0, %s158
      %s175 = sphi 0, %s159
      %s181 = sphi 0, %s183
      %s184 = sphi 0, %s181
      %s185 = sphi 0, %s184
      %s201 = sphi 0, %s185
      %s205 = sphi 0, %s205
      %s207 = sphi 0, %s205
      %s208 = sphi 0, %s207
      %s222 = sphi 0, %s208
      %s228 = sphi 0, %s230
      %s231 = sphi 0, %s228
      %s232 = sphi 0, %s231
      %s248 = sphi 0, %s232
    $region4: #{tpu_custom_call.1} parent=1 // loop_header_branch
      %28 = sbr.rel (%p26) target = $region8
    $region5: #{tpu_custom_call.1} parent=1 // loop_body
      %s30 = ssub.s32 %s25, 1
      %s31 = ssub.s32 %s25, 2
      %s38 = sadd.s32 1, %s33
      %p39 = scmp.ge.s32.totalorder %s38, 4
      %s40 = scalar_select %p39, 0, %s38
      %s41 = sadd.s32 1, %s32
      %s42 = scalar_select %p39, %s41, %s32
      %p43 = scmp.ge.s32.totalorder %s42, 3
      %s44 = scalar_select %p43, 0, %s42
      %s45 = ssub.s32 %s32, %s44
      %p46 = scmp.eq.s32.totalorder %s45, 0
      %s48 = sadd.s32 %s47, 1
      %s49 = scalar_select %p46, %s47, %s48
      %p52 = pneg %p46
      %p53 = scmp.eq.s32.totalorder %s25, 11
      %p54 = por %p52, %p53
      %p55 = scmp.ne.s32.totalorder %s47, %s50
      %p56 = scmp.eq.s32.totalorder %s25, 0
      %p57 = por %p55, %p56
      %p58 = scmp.ne.s32.totalorder %s47, %s50
      %p59 = scmp.eq.s32.totalorder %s30, 11
      %p60 = por %p58, %p59
      %p61 = scmp.ne.s32.totalorder %s50, %s51
      %p62 = scmp.eq.s32.totalorder %s30, 0
      %p63 = por %p61, %p62
      %p64 = scmp.ne.s32.totalorder %s50, %s51
      %p65 = scmp.eq.s32.totalorder %s31, 11
      %p66 = por %p64, %p65
      %p68 = scmp.ne.s32.totalorder %s51, %s67
      %p69 = scmp.eq.s32.totalorder %s31, 0
      %p70 = por %p68, %p69
      %s71 = ssub.s32 %s33, %s40
      %p72 = scmp.eq.s32.totalorder %s71, 0
      %s74 = sadd.s32 %s73, 1
      %s75 = scalar_select %p72, %s73, %s74
      %p78 = pneg %p72
      %p79 = scmp.eq.s32.totalorder %s25, 11
      %p80 = por %p78, %p79
      %p81 = scmp.ne.s32.totalorder %s73, %s76
      %p82 = scmp.eq.s32.totalorder %s25, 0
      %p83 = por %p81, %p82
      %p84 = scmp.ne.s32.totalorder %s73, %s76
      %p85 = scmp.eq.s32.totalorder %s30, 11
      %p86 = por %p84, %p85
      %p87 = scmp.ne.s32.totalorder %s76, %s77
      %p88 = scmp.eq.s32.totalorder %s30, 0
      %p89 = por %p87, %p88
      %p90 = scmp.ne.s32.totalorder %s76, %s77
      %p91 = scmp.eq.s32.totalorder %s31, 11
      %p92 = por %p90, %p91
      %p94 = scmp.ne.s32.totalorder %s77, %s93
      %p95 = scmp.eq.s32.totalorder %s31, 0
      %p96 = por %p94, %p95
      %s97 = sadd.s32 %s33, 4
      %s98 = sadd.s32 %s40, 4
      %s99 = ssub.s32 %s97, %s98
      %p100 = scmp.eq.s32.totalorder %s99, 0
      %s102 = sadd.s32 %s101, 1
      %s103 = scalar_select %p100, %s101, %s102
      %p106 = pneg %p100
      %p107 = scmp.eq.s32.totalorder %s25, 11
      %p108 = por %p106, %p107
      %p109 = scmp.ne.s32.totalorder %s101, %s104
      %p110 = scmp.eq.s32.totalorder %s25, 0
      %p111 = por %p109, %p110
      %p112 = scmp.ne.s32.totalorder %s101, %s104
      %p113 = scmp.eq.s32.totalorder %s30, 11
      %p114 = por %p112, %p113
      %p115 = scmp.ne.s32.totalorder %s104, %s105
      %p116 = scmp.eq.s32.totalorder %s30, 0
      %p117 = por %p115, %p116
      %p118 = scmp.ne.s32.totalorder %s104, %s105
      %p119 = scmp.eq.s32.totalorder %s31, 11
      %p120 = por %p118, %p119
      %p122 = scmp.ne.s32.totalorder %s105, %s121
      %p123 = scmp.eq.s32.totalorder %s31, 0
      %p124 = por %p122, %p123
      %s125 = ssub.s32 %s33, %s40
      %p126 = scmp.eq.s32.totalorder %s125, 0
      %s128 = sadd.s32 %s127, 1
      %s129 = scalar_select %p126, %s127, %s128
      %p132 = pneg %p126
      %p133 = scmp.eq.s32.totalorder %s25, 11
      %p134 = por %p132, %p133
      %p135 = scmp.ne.s32.totalorder %s127, %s130
      %p136 = scmp.eq.s32.totalorder %s25, 0
      %p137 = por %p135, %p136
      %p138 = scmp.ne.s32.totalorder %s127, %s130
      %p139 = scmp.eq.s32.totalorder %s30, 11
      %p140 = por %p138, %p139
      %p141 = scmp.ne.s32.totalorder %s130, %s131
      %p142 = scmp.eq.s32.totalorder %s30, 0
      %p143 = por %p141, %p142
      %p144 = scmp.ne.s32.totalorder %s130, %s131
      %p145 = scmp.eq.s32.totalorder %s31, 11
      %p146 = por %p144, %p145
      %p148 = scmp.ne.s32.totalorder %s131, %s147
      %p149 = scmp.eq.s32.totalorder %s31, 0
      %p150 = por %p148, %p149
      %s151 = sadd.s32 %s33, 4
      %s152 = sadd.s32 %s40, 4
      %s153 = ssub.s32 %s151, %s152
      %p154 = scmp.eq.s32.totalorder %s153, 0
      %s156 = sadd.s32 %s155, 1
      %s157 = scalar_select %p154, %s155, %s156
      %p160 = pneg %p154
      %p161 = scmp.eq.s32.totalorder %s25, 11
      %p162 = por %p160, %p161
      %p163 = scmp.ne.s32.totalorder %s155, %s158
      %p164 = scmp.eq.s32.totalorder %s25, 0
      %p165 = por %p163, %p164
      %p166 = scmp.ne.s32.totalorder %s155, %s158
      %p167 = scmp.eq.s32.totalorder %s30, 11
      %p168 = por %p166, %p167
      %p169 = scmp.ne.s32.totalorder %s158, %s159
      %p170 = scmp.eq.s32.totalorder %s30, 0
      %p171 = por %p169, %p170
      %p172 = scmp.ne.s32.totalorder %s158, %s159
      %p173 = scmp.eq.s32.totalorder %s31, 11
      %p174 = por %p172, %p173
      %p176 = scmp.ne.s32.totalorder %s159, %s175
      %p177 = scmp.eq.s32.totalorder %s31, 0
      %p178 = por %p176, %p177
      %s179 = ssub.s32 %s33, %s40
      %p180 = scmp.eq.s32.totalorder %s179, 0
      %s182 = sadd.s32 %s181, 1
      %s183 = scalar_select %p180, %s181, %s182
      %p186 = pneg %p180
      %p187 = scmp.eq.s32.totalorder %s25, 11
      %p188 = por %p186, %p187
      %p189 = scmp.ne.s32.totalorder %s181, %s184
      %p190 = scmp.eq.s32.totalorder %s25, 0
      %p191 = por %p189, %p190
      %p192 = scmp.ne.s32.totalorder %s181, %s184
      %p193 = scmp.eq.s32.totalorder %s30, 11
      %p194 = por %p192, %p193
      %p195 = scmp.ne.s32.totalorder %s184, %s185
      %p196 = scmp.eq.s32.totalorder %s30, 0
      %p197 = por %p195, %p196
      %p198 = scmp.ne.s32.totalorder %s184, %s185
      %p199 = scmp.eq.s32.totalorder %s31, 11
      %p200 = por %p198, %p199
      %p202 = scmp.ne.s32.totalorder %s185, %s201
      %p203 = scmp.eq.s32.totalorder %s31, 0
      %p204 = por %p202, %p203
      %s206 = sadd.s32 %s205, 1
      %p209 = scmp.eq.s32.totalorder %s25, 11
      %p210 = scmp.ne.s32.totalorder %s205, %s207
      %p211 = scmp.eq.s32.totalorder %s25, 0
      %p212 = por %p210, %p211
      %p213 = scmp.ne.s32.totalorder %s205, %s207
      %p214 = scmp.eq.s32.totalorder %s30, 11
      %p215 = por %p213, %p214
      %p216 = scmp.ne.s32.totalorder %s207, %s208
      %p217 = scmp.eq.s32.totalorder %s30, 0
      %p218 = por %p216, %p217
      %p219 = scmp.ne.s32.totalorder %s207, %s208
      %p220 = scmp.eq.s32.totalorder %s31, 11
      %p221 = por %p219, %p220
      %p223 = scmp.ne.s32.totalorder %s208, %s222
      %p224 = scmp.eq.s32.totalorder %s31, 0
      %p225 = por %p223, %p224
      %s226 = ssub.s32 %s32, %s44
      %p227 = scmp.eq.s32.totalorder %s226, 0
      %s229 = sadd.s32 %s228, 1
      %s230 = scalar_select %p227, %s228, %s229
      %p233 = pneg %p227
      %p234 = scmp.eq.s32.totalorder %s25, 11
      %p235 = por %p233, %p234
      %p236 = scmp.ne.s32.totalorder %s228, %s231
      %p237 = scmp.eq.s32.totalorder %s25, 0
      %p238 = por %p236, %p237
      %p239 = scmp.ne.s32.totalorder %s228, %s231
      %p240 = scmp.eq.s32.totalorder %s30, 11
      %p241 = por %p239, %p240
      %p242 = scmp.ne.s32.totalorder %s231, %s232
      %p243 = scmp.eq.s32.totalorder %s30, 0
      %p244 = por %p242, %p243
      %p245 = scmp.ne.s32.totalorder %s231, %s232
      %p246 = scmp.eq.s32.totalorder %s31, 11
      %p247 = por %p245, %p246
      %p249 = scmp.ne.s32.totalorder %s232, %s248
      %p250 = scmp.eq.s32.totalorder %s31, 0
      %p251 = por %p249, %p250
      %p252 = scmp.le.s32.totalorder 1, %s25
      %p253 = scmp.lt.s32.totalorder %s25, 13
      %p254 = pnand %p252, %p253
      %p255 = pneg %p254
      // Predicated region
      $region9: #{tpu_custom_call.1} parent=5 // pred_check
        _
      $region10: #{tpu_custom_call.1} parent=5 // pred_check_branch
        %257 = sbr.rel (%p254) target = $region12
      $region11: #{tpu_custom_call.1} parent=5 // pred_region
        %s258 = ssub.s32 %s25, 1
        // Predicated region
        $region13: #{tpu_custom_call.1} parent=11 // pred_check
          %p259 = pneg %p218
        $region14: #{tpu_custom_call.1} parent=11 // pred_check_branch
          %261 = sbr.rel (%p259) target = $region16
        $region15: #{tpu_custom_call.1} parent=11 // pred_region
          _
        $region16: #{tpu_custom_call.1} parent=11 // pred_fallthru
          _
      $region12: #{tpu_custom_call.1} parent=5 // pred_fallthru
        _
      %p262 = scmp.lt.s32.totalorder %s25, 12
      // Predicated region
      $region17: #{tpu_custom_call.1} parent=5 // pred_check
        %p263 = pneg %p262
      $region18: #{tpu_custom_call.1} parent=5 // pred_check_branch
        %265 = sbr.rel (%p263) target = $region20
      $region19: #{tpu_custom_call.1} parent=5 // pred_region
        // Predicated region
        $region21: #{tpu_custom_call.1} parent=19 // pred_check
          %p266 = pneg %p57
        $region22: #{tpu_custom_call.1} parent=19 // pred_check_branch
          %268 = sbr.rel (%p266) target = $region24
        $region23: #{tpu_custom_call.1} parent=19 // pred_region
          %s269 = sand.u32 %s47, 1
          %s270 = scalar_lea.sflag [#allocation4], %s269
          %s271 = sand.u32 %s47, 1
          %s272 = smul.addr %s271, 8
          %s273 = scalar_lea.vmem [#allocation3], %s272
          %s275 = ssub.s32 128, 128
          %276 = vsyncadd %s270, %s275
          %s277 = smul.addr %s32, 128
          %s278 = scalar_lea.hbm %s0, %s277
          %s280 = sshll.u32 %s273, 4
          %s281 = int_to_ptr.vmem [resolvable:$true] %s280
          %283 = dma.hbm_to_vmem [thread:$0]  %s278, 128, %s281, %s270
        $region24: #{tpu_custom_call.1} parent=19 // pred_fallthru
          _
        // Predicated region
        $region25: #{tpu_custom_call.1} parent=19 // pred_check
          %p284 = pneg %p83
        $region26: #{tpu_custom_call.1} parent=19 // pred_check_branch
          %286 = sbr.rel (%p284) target = $region28
        $region27: #{tpu_custom_call.1} parent=19 // pred_region
          %s287 = sand.u32 %s25, 1
          %s288 = scalar_lea.sflag [#allocation7], %s287
          %s289 = sand.u32 %s73, 1
          %s290 = smul.addr %s289, 128
          %s291 = scalar_lea.vmem [#allocation6], %s290
          %s293 = ssub.s32 2048, 2048
          %294 = vsyncadd %s288, %s293
          %s295 = smul.addr %s33, 128
          %s296 = scalar_lea.hbm %s1, %s295
          %s297 = sshll.u32 %s291, 4
          %s298 = int_to_ptr.vmem [resolvable:$true] %s297
          %303 = dma.hbm_to_vmem [thread:$0]  %s296, 2048, %s298, %s288, 1024, 128, 8
        $region28: #{tpu_custom_call.1} parent=19 // pred_fallthru
          _
        // Predicated region
        $region29: #{tpu_custom_call.1} parent=19 // pred_check
          %p304 = pneg %p111
        $region30: #{tpu_custom_call.1} parent=19 // pred_check_branch
          %306 = sbr.rel (%p304) target = $region32
        $region31: #{tpu_custom_call.1} parent=19 // pred_region
          %s307 = sand.u32 %s25, 1
          %s308 = scalar_lea.sflag [#allocation7], %s307
          %s309 = sand.u32 %s101, 1
          %s310 = smul.addr %s309, 128
          %s311 = scalar_lea.vmem [#allocation8], %s310
          %s312 = sadd.s32 %s33, 4
          %s314 = ssub.s32 2048, 2048
          %315 = vsyncadd %s308, %s314
          %s316 = smul.addr %s312, 128
          %s317 = scalar_lea.hbm %s2, %s316
          %s318 = sshll.u32 %s311, 4
          %s319 = int_to_ptr.vmem [resolvable:$true] %s318
          %324 = dma.hbm_to_vmem [thread:$0]  %s317, 2048, %s319, %s308, 1024, 128, 8
        $region32: #{tpu_custom_call.1} parent=19 // pred_fallthru
          _
        // Predicated region
        $region33: #{tpu_custom_call.1} parent=19 // pred_check
          %p325 = pneg %p137
        $region34: #{tpu_custom_call.1} parent=19 // pred_check_branch
          %327 = sbr.rel (%p325) target = $region36
        $region35: #{tpu_custom_call.1} parent=19 // pred_region
          %p328 = scmp.lt.s32.totalorder %s33, 7
          %s329 = scalar_select %p328, %s33, 7
          %s330 = scalar_lea.vmem %s3, %s329
        $region36: #{tpu_custom_call.1} parent=19 // pred_fallthru
          _
        // Predicated region
        $region37: #{tpu_custom_call.1} parent=19 // pred_check
          %p331 = pneg %p165
        $region38: #{tpu_custom_call.1} parent=19 // pred_check_branch
          %333 = sbr.rel (%p331) target = $region40
        $region39: #{tpu_custom_call.1} parent=19 // pred_region
          %s334 = sand.u32 %s25, 1
          %s335 = scalar_lea.sflag [#allocation10], %s334
          %s336 = sand.u32 %s155, 1
          %s337 = scalar_lea.vmem [#allocation9], %s336
          %s338 = sadd.s32 %s33, 4
          %s340 = ssub.s32 16, 16
          %341 = vsyncadd %s335, %s340
          %s342 = smul.addr %s338, 16
          %s343 = scalar_lea.hbm %s4, %s342
          %s345 = sshll.u32 %s337, 4
          %s346 = int_to_ptr.vmem [resolvable:$true] %s345
          %348 = dma.hbm_to_vmem [thread:$0]  %s343, 16, %s346, %s335
        $region40: #{tpu_custom_call.1} parent=19 // pred_fallthru
          _
        // Predicated region
        $region41: #{tpu_custom_call.1} parent=19 // pred_check
          %p349 = pneg %p191
        $region42: #{tpu_custom_call.1} parent=19 // pred_check_branch
          %351 = sbr.rel (%p349) target = $region44
        $region43: #{tpu_custom_call.1} parent=19 // pred_region
          %s352 = sand.u32 %s25, 1
          %s353 = scalar_lea.sflag [#allocation10], %s352
          %s354 = sand.u32 %s181, 1
          %s355 = smul.addr %s354, 128
          %s356 = scalar_lea.vmem [#allocation11], %s355
          %s357 = smul.u32 16, %s33
          %s359 = ssub.s32 2048, 2048
          %360 = vsyncadd %s353, %s359
          %s361 = smul.addr %s357, 128
          %s362 = scalar_lea.hbm %s5, %s361
          %s363 = sshll.u32 %s356, 4
          %s364 = int_to_ptr.vmem [resolvable:$true] %s363
          %369 = dma.hbm_to_vmem [thread:$0]  %s362, 2048, %s364, %s353, 128, 128, 8
        $region44: #{tpu_custom_call.1} parent=19 // pred_fallthru
          _
      $region20: #{tpu_custom_call.1} parent=5 // pred_fallthru
        _
      %p370 = scmp.le.s32.totalorder 1, %s25
      %p371 = scmp.lt.s32.totalorder %s25, 13
      %p372 = pnand %p370, %p371
      %p373 = pneg %p372
      // Predicated region
      $region45: #{tpu_custom_call.1} parent=5 // pred_check
        _
      $region46: #{tpu_custom_call.1} parent=5 // pred_check_branch
        %375 = sbr.rel (%p372) target = $region48
      $region47: #{tpu_custom_call.1} parent=5 // pred_region
        %s376 = ssub.s32 %s25, 1
        %s377 = sand.u32 %s50, 1
        %s378 = scalar_lea.sflag [#allocation4], %s377
        %s379 = sand.u32 %s50, 1
        %s380 = smul.addr %s379, 8
        %s381 = scalar_lea.vmem [#allocation3], %s380
        // Predicated region
        $region49: #{tpu_custom_call.1} parent=47 // pred_check
          %p382 = pneg %p63
        $region50: #{tpu_custom_call.1} parent=47 // pred_check_branch
          %384 = sbr.rel (%p382) target = $region52
        $region51: #{tpu_custom_call.1} parent=47 // pred_region
          %385 = dma.done %s378, 128
        $region52: #{tpu_custom_call.1} parent=47 // pred_fallthru
          _
        %s386 = sand.u32 %s30, 1
        %s387 = scalar_lea.sflag [#allocation7], %s386
        %s388 = sand.u32 %s76, 1
        %s389 = smul.addr %s388, 128
        %s390 = scalar_lea.vmem [#allocation6], %s389
        // Predicated region
        $region53: #{tpu_custom_call.1} parent=47 // pred_check
          %p391 = pneg %p89
        $region54: #{tpu_custom_call.1} parent=47 // pred_check_branch
          %393 = sbr.rel (%p391) target = $region56
        $region55: #{tpu_custom_call.1} parent=47 // pred_region
          %394 = dma.done %s387, 2048
        $region56: #{tpu_custom_call.1} parent=47 // pred_fallthru
          _
        %s395 = sand.u32 %s30, 1
        %s396 = scalar_lea.sflag [#allocation7], %s395
        %s397 = sand.u32 %s104, 1
        %s398 = smul.addr %s397, 128
        %s399 = scalar_lea.vmem [#allocation8], %s398
        // Predicated region
        $region57: #{tpu_custom_call.1} parent=47 // pred_check
          %p400 = pneg %p117
        $region58: #{tpu_custom_call.1} parent=47 // pred_check_branch
          %402 = sbr.rel (%p400) target = $region60
        $region59: #{tpu_custom_call.1} parent=47 // pred_region
          %403 = dma.done %s396, 2048
        $region60: #{tpu_custom_call.1} parent=47 // pred_fallthru
          _
        %s404 = sand.u32 %s30, 1
        %s405 = scalar_lea.sflag [#allocation10], %s404
        %s406 = sand.u32 %s158, 1
        %s407 = scalar_lea.vmem [#allocation9], %s406
        // Predicated region
        $region61: #{tpu_custom_call.1} parent=47 // pred_check
          %p408 = pneg %p171
        $region62: #{tpu_custom_call.1} parent=47 // pred_check_branch
          %410 = sbr.rel (%p408) target = $region64
        $region63: #{tpu_custom_call.1} parent=47 // pred_region
          %411 = dma.done %s405, 16
        $region64: #{tpu_custom_call.1} parent=47 // pred_fallthru
          _
        %s412 = sand.u32 %s30, 1
        %s413 = scalar_lea.sflag [#allocation10], %s412
        %s414 = sand.u32 %s184, 1
        %s415 = smul.addr %s414, 128
        %s416 = scalar_lea.vmem [#allocation11], %s415
        // Predicated region
        $region65: #{tpu_custom_call.1} parent=47 // pred_check
          %p417 = pneg %p197
        $region66: #{tpu_custom_call.1} parent=47 // pred_check_branch
          %419 = sbr.rel (%p417) target = $region68
        $region67: #{tpu_custom_call.1} parent=47 // pred_region
          %420 = dma.done %s413, 2048
        $region68: #{tpu_custom_call.1} parent=47 // pred_fallthru
          _
        %s421 = sand.u32 %s50, 1
        %s422 = scalar_lea.sflag [#allocation4], %s421
        %s423 = sand.u32 %s50, 1
        %s424 = smul.addr %s423, 8
        %s425 = scalar_lea.vmem [#allocation3], %s424
        %p426 = pneg %p63
        %p427 = pneg %p60
        %s428 = sand.u32 %s30, 1
        %s429 = scalar_lea.sflag [#allocation7], %s428
        %s430 = sand.u32 %s76, 1
        %s431 = smul.addr %s430, 128
        %s432 = scalar_lea.vmem [#allocation6], %s431
        %p433 = pneg %p89
        %p434 = pneg %p86
        %s435 = sand.u32 %s30, 1
        %s436 = scalar_lea.sflag [#allocation7], %s435
        %s437 = sand.u32 %s104, 1
        %s438 = smul.addr %s437, 128
        %s439 = scalar_lea.vmem [#allocation8], %s438
        %p440 = pneg %p117
        %p441 = pneg %p114
        %p442 = scmp.lt.s32.totalorder %s35, 7
        %s443 = scalar_select %p442, %s35, 7
        %s444 = scalar_lea.vmem %s3, %s443
        %p445 = pneg %p143
        %p446 = pneg %p140
        %s447 = sand.u32 %s30, 1
        %s448 = scalar_lea.sflag [#allocation10], %s447
        %s449 = sand.u32 %s158, 1
        %s450 = scalar_lea.vmem [#allocation9], %s449
        %p451 = pneg %p171
        %p452 = pneg %p168
        %s453 = sand.u32 %s30, 1
        %s454 = scalar_lea.sflag [#allocation10], %s453
        %s455 = sand.u32 %s184, 1
        %s456 = smul.addr %s455, 128
        %s457 = scalar_lea.vmem [#allocation11], %s456
        %p458 = pneg %p197
        %p459 = pneg %p194
        %p460 = pneg %p218
        %p461 = pneg %p215
        %p462 = pneg %p244
        %p463 = pneg %p241
        %s464 = sand.u32 %s231, 1
        %s465 = scalar_lea.sflag [#allocation5], %s464
        %s466 = sand.u32 %s231, 1
        %s467 = smul.addr %s466, 8
        %s468 = scalar_lea.vmem [#allocation12], %s467
        %s469 = sadd.s32 %s35, 4
        %p470 = scmp.lt.s32.totalorder %s35, 7
        %s471 = scalar_select %p470, %s35, 7
        %s472 = scalar_lea.vmem %s3, %s471
        %s473 = sadd.s32 %s35, 4
        %s474 = smul.u32 16, %s35
        %p475 = scmp.eq.s32.totalorder %s35, 0
        // Predicated region
        $region69: #{tpu_custom_call.1} parent=47 // pred_check
          %p476 = pneg %p475
        $region70: #{tpu_custom_call.1} parent=47 // pred_check_branch
          %478 = sbr.rel (%p476) target = $region72
        $region71: #{tpu_custom_call.1} parent=47 // pred_region
          %v479 = vld [vmem:[%s6] sm:$0x1]
          %v481 = vlaneseq
          %v482 = vshrl.u32 %v481, 7
          %v483 = vsub.s32 0, %v482
          %v484 = vrot.slane %v479, %v483
          %486 = vst [vmem:[#allocation2] sm:$0xff] %v484
        $region72: #{tpu_custom_call.1} parent=47 // pred_fallthru
          _
        %v487 = vld [vmem:[%s381] sm:$0xff]
        %v488 = vld [vmem:[%s390] sm:$0xff]
        %v489 = vld [vmem:[%s390 + $0x8] sm:$0xff]
        %v490 = vld [vmem:[%s390 + $0x10] sm:$0xff]
        %v491 = vld [vmem:[%s390 + $0x18] sm:$0xff]
        %v492 = vld [vmem:[%s390 + $0x20] sm:$0xff]
        %v493 = vld [vmem:[%s390 + $0x28] sm:$0xff]
        %v494 = vld [vmem:[%s390 + $0x30] sm:$0xff]
        %v495 = vld [vmem:[%s390 + $0x38] sm:$0xff]
        %v496 = vld [vmem:[%s390 + $0x40] sm:$0xff]
        %v497 = vld [vmem:[%s390 + $0x48] sm:$0xff]
        %v498 = vld [vmem:[%s390 + $0x50] sm:$0xff]
        %v499 = vld [vmem:[%s390 + $0x58] sm:$0xff]
        %v500 = vld [vmem:[%s390 + $0x60] sm:$0xff]
        %v501 = vld [vmem:[%s390 + $0x68] sm:$0xff]
        %v502 = vld [vmem:[%s390 + $0x70] sm:$0xff]
        %v503 = vld [vmem:[%s390 + $0x78] sm:$0xff]
        %v504 = vld [vmem:[%s399] sm:$0xff]
        %v505 = vld [vmem:[%s399 + $0x8] sm:$0xff]
        %v506 = vld [vmem:[%s399 + $0x10] sm:$0xff]
        %v507 = vld [vmem:[%s399 + $0x18] sm:$0xff]
        %v508 = vld [vmem:[%s399 + $0x20] sm:$0xff]
        %v509 = vld [vmem:[%s399 + $0x28] sm:$0xff]
        %v510 = vld [vmem:[%s399 + $0x30] sm:$0xff]
        %v511 = vld [vmem:[%s399 + $0x38] sm:$0xff]
        %v512 = vld [vmem:[%s399 + $0x40] sm:$0xff]
        %v513 = vld [vmem:[%s399 + $0x48] sm:$0xff]
        %v514 = vld [vmem:[%s399 + $0x50] sm:$0xff]
        %v515 = vld [vmem:[%s399 + $0x58] sm:$0xff]
        %v516 = vld [vmem:[%s399 + $0x60] sm:$0xff]
        %v517 = vld [vmem:[%s399 + $0x68] sm:$0xff]
        %v518 = vld [vmem:[%s399 + $0x70] sm:$0xff]
        %v519 = vld [vmem:[%s399 + $0x78] sm:$0xff]
        %v520 = vld [vmem:[%s472] sm:$0x1]
        %v522 = vlaneseq
        %v523 = vshrl.u32 %v522, 7
        %v524 = vsub.s32 0, %v523
        %v525 = vrot.slane %v520, %v524
        %527 = vmatprep.subr.mxu0 0.0
        %528 = vmatpush1.msra.mxu0 %v488
        %529 = vmatprep.subr.mxu0 0.0
        %530 = vmatpush1.msra.mxu0 %v489
        %531 = vmatprep.subr.mxu0 0.0
        %532 = vmatpush1.msra.mxu0 %v490
        %533 = vmatprep.subr.mxu0 0.0
        %534 = vmatpush1.msra.mxu0 %v491
        %535 = vmatprep.subr.mxu0 0.0
        %536 = vmatpush1.msra.mxu0 %v492
        %537 = vmatprep.subr.mxu0 0.0
        %538 = vmatpush1.msra.mxu0 %v493
        %539 = vmatprep.subr.mxu0 0.0
        %540 = vmatpush1.msra.mxu0 %v494
        %541 = vmatprep.subr.mxu0 0.0
        %542 = vmatpush1.msra.mxu0 %v495
        %543 = vmatprep.subr.mxu0 0.0
        %544 = vmatpush1.msra.mxu0 %v496
        %545 = vmatprep.subr.mxu0 0.0
        %546 = vmatpush1.msra.mxu0 %v497
        %547 = vmatprep.subr.mxu0 0.0
        %548 = vmatpush1.msra.mxu0 %v498
        %549 = vmatprep.subr.mxu0 0.0
        %550 = vmatpush1.msra.mxu0 %v499
        %551 = vmatprep.subr.mxu0 0.0
        %552 = vmatpush1.msra.mxu0 %v500
        %553 = vmatprep.subr.mxu0 0.0
        %554 = vmatpush1.msra.mxu0 %v501
        %555 = vmatprep.subr.mxu0 0.0
        %556 = vmatpush1.msra.mxu0 %v502
        %557 = vmatprep.subr.mxu0 0.0
        %558 = vmatpush1.msra.mxu0 %v503
        %559 = vmatprep.subr.mxu0 0.0
        %560 = vmatpush1.msra.mxu0 0.0
        %561 = vmatprep.subr.mxu0 0.0
        %562 = vmatpush1.msra.mxu0 0.0
        %563 = vmatprep.subr.mxu0 0.0
        %564 = vmatpush1.msra.mxu0 0.0
        %565 = vmatprep.subr.mxu0 0.0
        %566 = vmatpush1.msra.mxu0 0.0
        %567 = vmatprep.subr.mxu0 0.0
        %568 = vmatpush1.msra.mxu0 0.0
        %569 = vmatprep.subr.mxu0 0.0
        %570 = vmatpush1.msra.mxu0 0.0
        %571 = vmatprep.subr.mxu0 0.0
        %572 = vmatpush1.msra.mxu0 0.0
        %573 = vmatprep.subr.mxu0 0.0
        %574 = vmatpush1.msra.mxu0 0.0
        %575 = vmatprep.subr.mxu0 0.0
        %576 = vmatpush1.msra.mxu0 0.0
        %577 = vmatprep.subr.mxu0 0.0
        %578 = vmatpush1.msra.mxu0 0.0
        %579 = vmatprep.subr.mxu0 0.0
        %580 = vmatpush1.msra.mxu0 0.0
        %581 = vmatprep.subr.mxu0 0.0
        %582 = vmatpush1.msra.mxu0 0.0
        %583 = vmatprep.subr.mxu0 0.0
        %584 = vmatpush1.msra.mxu0 0.0
        %585 = vmatprep.subr.mxu0 0.0
        %586 = vmatpush1.msra.mxu0 0.0
        %587 = vmatprep.subr.mxu0 0.0
        %588 = vmatpush1.msra.mxu0 0.0
        %589 = vmatprep.subr.mxu0 0.0
        %590 = vmatpush1.msra.mxu0 0.0
        %591 = vmatprep.mubr.f32.mxu0 0.0
        %592 = vmatmul.mubr.f32.gmra.mrb[0].mxu0 %v487
        %v593 = vpop.f32.mrb[0].mxu0
        %v594 = vadd.f32 %v525, %v593
        %v595 = vpop.f32.mrb[0].mxu0
        %596 = vdwg.mxu0
        %v597 = vld [vmem:[%s407] sm:$0x1]
        %v599 = vlaneseq
        %v600 = vshrl.u32 %v599, 7
        %v601 = vsub.s32 0, %v600
        %v602 = vrot.slane %v597, %v601
        %604 = vmatprep.subr.mxu0 0.0
        %605 = vmatpush1.msra.mxu0 %v504
        %606 = vmatprep.subr.mxu0 0.0
        %607 = vmatpush1.msra.mxu0 %v505
        %608 = vmatprep.subr.mxu0 0.0
        %609 = vmatpush1.msra.mxu0 %v506
        %610 = vmatprep.subr.mxu0 0.0
        %611 = vmatpush1.msra.mxu0 %v507
        %612 = vmatprep.subr.mxu0 0.0
        %613 = vmatpush1.msra.mxu0 %v508
        %614 = vmatprep.subr.mxu0 0.0
        %615 = vmatpush1.msra.mxu0 %v509
        %616 = vmatprep.subr.mxu0 0.0
        %617 = vmatpush1.msra.mxu0 %v510
        %618 = vmatprep.subr.mxu0 0.0
        %619 = vmatpush1.msra.mxu0 %v511
        %620 = vmatprep.subr.mxu0 0.0
        %621 = vmatpush1.msra.mxu0 %v512
        %622 = vmatprep.subr.mxu0 0.0
        %623 = vmatpush1.msra.mxu0 %v513
        %624 = vmatprep.subr.mxu0 0.0
        %625 = vmatpush1.msra.mxu0 %v514
        %626 = vmatprep.subr.mxu0 0.0
        %627 = vmatpush1.msra.mxu0 %v515
        %628 = vmatprep.subr.mxu0 0.0
        %629 = vmatpush1.msra.mxu0 %v516
        %630 = vmatprep.subr.mxu0 0.0
        %631 = vmatpush1.msra.mxu0 %v517
        %632 = vmatprep.subr.mxu0 0.0
        %633 = vmatpush1.msra.mxu0 %v518
        %634 = vmatprep.subr.mxu0 0.0
        %635 = vmatpush1.msra.mxu0 %v519
        %636 = vmatprep.subr.mxu0 0.0
        %637 = vmatpush1.msra.mxu0 0.0
        %638 = vmatprep.subr.mxu0 0.0
        %639 = vmatpush1.msra.mxu0 0.0
        %640 = vmatprep.subr.mxu0 0.0
        %641 = vmatpush1.msra.mxu0 0.0
        %642 = vmatprep.subr.mxu0 0.0
        %643 = vmatpush1.msra.mxu0 0.0
        %644 = vmatprep.subr.mxu0 0.0
        %645 = vmatpush1.msra.mxu0 0.0
        %646 = vmatprep.subr.mxu0 0.0
        %647 = vmatpush1.msra.mxu0 0.0
        %648 = vmatprep.subr.mxu0 0.0
        %649 = vmatpush1.msra.mxu0 0.0
        %650 = vmatprep.subr.mxu0 0.0
        %651 = vmatpush1.msra.mxu0 0.0
        %652 = vmatprep.subr.mxu0 0.0
        %653 = vmatpush1.msra.mxu0 0.0
        %654 = vmatprep.subr.mxu0 0.0
        %655 = vmatpush1.msra.mxu0 0.0
        %656 = vmatprep.subr.mxu0 0.0
        %657 = vmatpush1.msra.mxu0 0.0
        %658 = vmatprep.subr.mxu0 0.0
        %659 = vmatpush1.msra.mxu0 0.0
        %660 = vmatprep.subr.mxu0 0.0
        %661 = vmatpush1.msra.mxu0 0.0
        %662 = vmatprep.subr.mxu0 0.0
        %663 = vmatpush1.msra.mxu0 0.0
        %664 = vmatprep.subr.mxu0 0.0
        %665 = vmatpush1.msra.mxu0 0.0
        %666 = vmatprep.subr.mxu0 0.0
        %667 = vmatpush1.msra.mxu0 0.0
        %668 = vmatprep.mubr.f32.mxu0 0.0
        %669 = vmatmul.mubr.f32.gmra.mrb[0].mxu0 %v487
        %v670 = vpop.f32.mrb[0].mxu0
        %v671 = vadd.f32 %v602, %v670
        %v672 = vpop.f32.mrb[0].mxu0
        %673 = vdwg.mxu0
        %v674 = vmul.f32 %v671, 0.5
        %v675 = vmul.f32 %v671, 0.70710677
        %v676 = verf.f32.pop %v675
        %v677 = vadd.f32 %v676, 1.0
        %v678 = vmul.f32 %v674, %v677
        %v679 = vmul.f32 %v594, %v678
        %v680 = vld [vmem:[#allocation2] sm:$0xff]
        %v681 = vld [vmem:[%s416] sm:$0xff]
        %v682 = vld [vmem:[%s416 + $0x8] sm:$0xff]
        %v683 = vld [vmem:[%s416 + $0x10] sm:$0xff]
        %v684 = vld [vmem:[%s416 + $0x18] sm:$0xff]
        %v685 = vld [vmem:[%s416 + $0x20] sm:$0xff]
        %v686 = vld [vmem:[%s416 + $0x28] sm:$0xff]
        %v687 = vld [vmem:[%s416 + $0x30] sm:$0xff]
        %v688 = vld [vmem:[%s416 + $0x38] sm:$0xff]
        %v689 = vld [vmem:[%s416 + $0x40] sm:$0xff]
        %v690 = vld [vmem:[%s416 + $0x48] sm:$0xff]
        %v691 = vld [vmem:[%s416 + $0x50] sm:$0xff]
        %v692 = vld [vmem:[%s416 + $0x58] sm:$0xff]
        %v693 = vld [vmem:[%s416 + $0x60] sm:$0xff]
        %v694 = vld [vmem:[%s416 + $0x68] sm:$0xff]
        %v695 = vld [vmem:[%s416 + $0x70] sm:$0xff]
        %v696 = vld [vmem:[%s416 + $0x78] sm:$0xff]
        %697 = vmatprep.subr.mxu0 0.0
        %698 = vmatpush1.msra.mxu0 %v681
        %699 = vmatprep.subr.mxu0 0.0
        %700 = vmatpush1.msra.mxu0 %v682
        %701 = vmatprep.subr.mxu0 0.0
        %702 = vmatpush1.msra.mxu0 %v683
        %703 = vmatprep.subr.mxu0 0.0
        %704 = vmatpush1.msra.mxu0 %v684
        %705 = vmatprep.subr.mxu0 0.0
        %706 = vmatpush1.msra.mxu0 %v685
        %707 = vmatprep.subr.mxu0 0.0
        %708 = vmatpush1.msra.mxu0 %v686
        %709 = vmatprep.subr.mxu0 0.0
        %710 = vmatpush1.msra.mxu0 %v687
        %711 = vmatprep.subr.mxu0 0.0
        %712 = vmatpush1.msra.mxu0 %v688
        %713 = vmatprep.subr.mxu0 0.0
        %714 = vmatpush1.msra.mxu0 %v689
        %715 = vmatprep.subr.mxu0 0.0
        %716 = vmatpush1.msra.mxu0 %v690
        %717 = vmatprep.subr.mxu0 0.0
        %718 = vmatpush1.msra.mxu0 %v691
        %719 = vmatprep.subr.mxu0 0.0
        %720 = vmatpush1.msra.mxu0 %v692
        %721 = vmatprep.subr.mxu0 0.0
        %722 = vmatpush1.msra.mxu0 %v693
        %723 = vmatprep.subr.mxu0 0.0
        %724 = vmatpush1.msra.mxu0 %v694
        %725 = vmatprep.subr.mxu0 0.0
        %726 = vmatpush1.msra.mxu0 %v695
        %727 = vmatprep.subr.mxu0 0.0
        %728 = vmatpush1.msra.mxu0 %v696
        %729 = vmatprep.subr.mxu0 0.0
        %730 = vmatpush1.msra.mxu0 0.0
        %731 = vmatprep.subr.mxu0 0.0
        %732 = vmatpush1.msra.mxu0 0.0
        %733 = vmatprep.subr.mxu0 0.0
        %734 = vmatpush1.msra.mxu0 0.0
        %735 = vmatprep.subr.mxu0 0.0
        %736 = vmatpush1.msra.mxu0 0.0
        %737 = vmatprep.subr.mxu0 0.0
        %738 = vmatpush1.msra.mxu0 0.0
        %739 = vmatprep.subr.mxu0 0.0
        %740 = vmatpush1.msra.mxu0 0.0
        %741 = vmatprep.subr.mxu0 0.0
        %742 = vmatpush1.msra.mxu0 0.0
        %743 = vmatprep.subr.mxu0 0.0
        %744 = vmatpush1.msra.mxu0 0.0
        %745 = vmatprep.subr.mxu0 0.0
        %746 = vmatpush1.msra.mxu0 0.0
        %747 = vmatprep.subr.mxu0 0.0
        %748 = vmatpush1.msra.mxu0 0.0
        %749 = vmatprep.subr.mxu0 0.0
        %750 = vmatpush1.msra.mxu0 0.0
        %751 = vmatprep.subr.mxu0 0.0
        %752 = vmatpush1.msra.mxu0 0.0
        %753 = vmatprep.subr.mxu0 0.0
        %754 = vmatpush1.msra.mxu0 0.0
        %755 = vmatprep.subr.mxu0 0.0
        %756 = vmatpush1.msra.mxu0 0.0
        %757 = vmatprep.subr.mxu0 0.0
        %758 = vmatpush1.msra.mxu0 0.0
        %759 = vmatprep.subr.mxu0 0.0
        %760 = vmatpush1.msra.mxu0 0.0
        %761 = vmatprep.mubr.f32.mxu0 0.0
        %762 = vmatmul.mubr.f32.gmra.mrb[0].mxu0 %v679
        %v763 = vpop.f32.mrb[0].mxu0
        %v764 = vadd.f32 0.0, %v763
        %v765 = vpop.f32.mrb[0].mxu0
        %766 = vdwg.mxu0
        %v767 = vadd.f32 %v680, %v764
        %768 = vst [vmem:[#allocation2] sm:$0xff] %v767
        %p769 = scmp.eq.s32.totalorder %s35, 3
        // Predicated region
        $region73: #{tpu_custom_call.1} parent=47 // pred_check
          %p770 = pneg %p769
        $region74: #{tpu_custom_call.1} parent=47 // pred_check_branch
          %772 = sbr.rel (%p770) target = $region76
        $region75: #{tpu_custom_call.1} parent=47 // pred_region
          %v773 = vld [vmem:[#allocation2] sm:$0xff]
          %774 = vst [vmem:[%s468] sm:$0xff] %v773
        $region76: #{tpu_custom_call.1} parent=47 // pred_fallthru
          _
        %s775 = sand.u32 %s231, 1
        %s776 = scalar_lea.sflag [#allocation5], %s775
        %s777 = sand.u32 %s231, 1
        %s778 = smul.addr %s777, 8
        %s779 = scalar_lea.vmem [#allocation12], %s778
        // Predicated region
        $region77: #{tpu_custom_call.1} parent=47 // pred_check
          %p780 = pneg %p241
        $region78: #{tpu_custom_call.1} parent=47 // pred_check_branch
          %782 = sbr.rel (%p780) target = $region80
        $region79: #{tpu_custom_call.1} parent=47 // pred_region
          %s784 = ssub.s32 128, 128
          %785 = vsyncadd %s776, %s784
          %s786 = smul.addr %s34, 128
          %s787 = scalar_lea.hbm %s7, %s786
          %s789 = sshll.u32 %s779, 4
          %s790 = int_to_ptr.vmem [resolvable:$true] %s789
          %792 = dma.vmem_to_hbm [thread:$0]  %s790, 128, %s787, %s776
        $region80: #{tpu_custom_call.1} parent=47 // pred_fallthru
          _
      $region48: #{tpu_custom_call.1} parent=5 // pred_fallthru
        _
      %p793 = scmp.le.s32.totalorder 2, %s25
      // Predicated region
      $region81: #{tpu_custom_call.1} parent=5 // pred_check
        %p794 = pneg %p793
      $region82: #{tpu_custom_call.1} parent=5 // pred_check_branch
        %796 = sbr.rel (%p794) target = $region84
      $region83: #{tpu_custom_call.1} parent=5 // pred_region
        %s797 = ssub.s32 %s25, 2
        // Predicated region
        $region85: #{tpu_custom_call.1} parent=83 // pred_check
          %p798 = pneg %p247
        $region86: #{tpu_custom_call.1} parent=83 // pred_check_branch
          %800 = sbr.rel (%p798) target = $region88
        $region87: #{tpu_custom_call.1} parent=83 // pred_region
          %s801 = sand.u32 %s232, 1
          %s802 = scalar_lea.sflag [#allocation5], %s801
          %s803 = sand.u32 %s232, 1
          %s804 = smul.addr %s803, 8
          %s805 = scalar_lea.vmem [#allocation12], %s804
          %806 = dma.done %s802, 128
        $region88: #{tpu_custom_call.1} parent=83 // pred_fallthru
          _
      $region84: #{tpu_custom_call.1} parent=5 // pred_fallthru
        _
    $region6: #{tpu_custom_call.1} parent=1 // loop_footer
      %s29 = sadd.s32 1, %s25
    $region7: #{tpu_custom_call.1} parent=1 // loop_footer_branch
      %24 = sbr.rel target = $region3
    $region8: #{tpu_custom_call.1} parent=1 // loop_exit
      _
    %807 = vsyncpa [#allocation4], 1
    %s808 = scalar_lea.sflag [#allocation4], 1
    %809 = vsyncpa %s808, 1
    %810 = vsyncpa [#allocation7], 1
    %s811 = scalar_lea.sflag [#allocation7], 1
    %812 = vsyncpa %s811, 1
    %813 = vsyncpa [#allocation10], 1
    %s814 = scalar_lea.sflag [#allocation10], 1
    %815 = vsyncpa %s814, 1
    %816 = vsyncpa [#allocation5], 1
    %s817 = scalar_lea.sflag [#allocation5], 1
    %818 = vsyncpa %s817, 1

</llo_original>
